<compile_context>
chip_gen: v5e
topology: v5e:2x2
jax: 0.10.0
libtpu: 0.0.40
codegen_flags: <defaults>
</compile_context>

<pallas_src>
import functools
import math

import jax
import jax.numpy as jnp
from jax.experimental import pallas as pl
from jax.experimental.pallas import tpu as pltpu


_LOG_SQRT_2PI = 0.5 * math.log(2.0 * math.pi)


def _round_up(x: int, m: int) -> int:
    return (x + m - 1) // m * m


def _actor_kernel(x_ref, eps_ref,
                  w1_ref, b1_ref, w2_ref, b2_ref, w3_ref, b3_ref,
                  wmu_ref, bmu_ref, wls_ref, bls_ref,
                  act_ref, lp_ref,
                  *, action_dim, max_action, deterministic):
    # x_ref: (TB, S_pad)   weights: (in_pad, out_pad)   biases: (1, out_pad)
    x = x_ref[...]

    h = jnp.maximum(
        jnp.dot(x, w1_ref[...], preferred_element_type=jnp.float32) + b1_ref[...], 0.0)
    h = jnp.maximum(
        jnp.dot(h, w2_ref[...], preferred_element_type=jnp.float32) + b2_ref[...], 0.0)
    h = jnp.maximum(
        jnp.dot(h, w3_ref[...], preferred_element_type=jnp.float32) + b3_ref[...], 0.0)

    mu = jnp.dot(h, wmu_ref[...], preferred_element_type=jnp.float32) + bmu_ref[...]
    log_sigma = jnp.dot(h, wls_ref[...], preferred_element_type=jnp.float32) + bls_ref[...]
    log_sigma = jnp.clip(log_sigma, -5.0, 2.0)
    sigma = jnp.exp(log_sigma)

    if deterministic:
        action = mu
    else:
        action = mu + sigma * eps_ref[...]

    tanh_action = jnp.tanh(action)
    act_ref[...] = (tanh_action * max_action).astype(act_ref.dtype)

    # Normal(mu, sigma).log_prob(action) + tanh correction, masked to the real
    # action lanes (padded lanes would otherwise contribute a constant).
    z = (action - mu) / sigma
    lp = -0.5 * z * z - log_sigma - _LOG_SQRT_2PI
    lp = lp - jnp.log(1.0 - tanh_action * tanh_action + 1e-6)
    lane = jax.lax.broadcasted_iota(jnp.int32, lp.shape, dimension=1)
    lp = jnp.where(lane < action_dim, lp, 0.0)
    lp_ref[...] = jnp.sum(lp, axis=-1, keepdims=True).astype(lp_ref.dtype)


def actor_forward(params, state, *, noise=None, deterministic=False,
                  max_action=1.0, batch_tile=8):
    """Fused Actor forward. state: [B, S] -> (tanh_action*[B, A], log_prob [B])."""
    w1, b1, w2, b2, w3, b3, w_mu, b_mu, w_ls, b_ls = params
    B, S = state.shape
    H = w1.shape[1]
    A = w_mu.shape[1]

    f32 = jnp.float32
    S_pad = _round_up(S, 128)
    H_pad = _round_up(H, 128)
    A_pad = _round_up(A, 128)
    TB = max(8, _round_up(batch_tile, 8))
    B_pad = _round_up(max(B, TB), TB)
    n_tiles = B_pad // TB

    def pad2(a, rows, cols):
        a = jnp.asarray(a, f32).reshape(a.shape[0] if a.ndim == 2 else 1, -1)
        return jnp.pad(a, ((0, rows - a.shape[0]), (0, cols - a.shape[1])))

    x_p = pad2(state, B_pad, S_pad)
    if noise is None:
        noise = jnp.zeros((B, A), f32)
    eps_p = pad2(noise, B_pad, A_pad)

    w1_p, b1_p = pad2(w1, S_pad, H_pad), pad2(b1, 1, H_pad)
    w2_p, b2_p = pad2(w2, H_pad, H_pad), pad2(b2, 1, H_pad)
    w3_p, b3_p = pad2(w3, H_pad, H_pad), pad2(b3, 1, H_pad)
    wmu_p, bmu_p = pad2(w_mu, H_pad, A_pad), pad2(b_mu, 1, A_pad)
    wls_p, bls_p = pad2(w_ls, H_pad, A_pad), pad2(b_ls, 1, A_pad)

    kernel = functools.partial(
        _actor_kernel, action_dim=A, max_action=float(max_action),
        deterministic=bool(deterministic))

    def batch_spec(shape):
        return pl.BlockSpec(shape, lambda i: (i, 0))

    def full_spec(shape):
        return pl.BlockSpec(shape, lambda i: (0, 0))

    flops = 2 * B_pad * (S_pad * H_pad + 2 * H_pad * H_pad + 2 * H_pad * A_pad)
    transcendentals = 3 * B_pad * A_pad  # exp, tanh, log
    bytes_accessed = 4 * (x_p.size + eps_p.size
                          + w1_p.size + w2_p.size + w3_p.size
                          + wmu_p.size + wls_p.size
                          + b1_p.size + b2_p.size + b3_p.size
                          + bmu_p.size + bls_p.size
                          + B_pad * A_pad + B_pad)

    act_pad, lp_pad = pl.pallas_call(
        kernel,
        out_shape=(jax.ShapeDtypeStruct((B_pad, A_pad), f32),
                   jax.ShapeDtypeStruct((B_pad, 1), f32)),
        grid_spec=pltpu.PrefetchScalarGridSpec(
            num_scalar_prefetch=0,
            grid=(n_tiles,),
            in_specs=[
                batch_spec((TB, S_pad)),          # state tile
                batch_spec((TB, A_pad)),          # noise tile
                full_spec((S_pad, H_pad)), full_spec((1, H_pad)),   # L1
                full_spec((H_pad, H_pad)), full_spec((1, H_pad)),   # L2
                full_spec((H_pad, H_pad)), full_spec((1, H_pad)),   # L3
                full_spec((H_pad, A_pad)), full_spec((1, A_pad)),   # mu head
                full_spec((H_pad, A_pad)), full_spec((1, A_pad)),   # log_sigma head
            ],
            out_specs=[
                batch_spec((TB, A_pad)),
                batch_spec((TB, 1)),
            ],
        ),
        compiler_params=pltpu.CompilerParams(
            dimension_semantics=("parallel",),
            vmem_limit_bytes=32 * 1024 * 1024,
        ),
        cost_estimate=pl.CostEstimate(
            flops=flops,
            transcendentals=transcendentals,
            bytes_accessed=bytes_accessed),
    )(x_p, eps_p, w1_p, b1_p, w2_p, b2_p, w3_p, b3_p,
      wmu_p, bmu_p, wls_p, bls_p)

    tanh_action = act_pad[:B, :A]
    log_prob = lp_pad[:B, 0]
    return tanh_action, log_prob


def init_actor_params(key, state_dim, action_dim, hidden_dim, dtype=jnp.float32):
    """Mirrors the PyTorch Actor init (functionally, not bit-exact):
    trunk Linears: default kaiming_uniform(a=sqrt(5)) weights, bias=0.1;
    mu / log_sigma: uniform(-1e-3, 1e-3) weights and biases.
    Weights are stored transposed as [in, out] for x @ W."""
    ks = jax.random.split(key, 7)

    def trunk_w(k, fan_in, fan_out):
        bound = 1.0 / math.sqrt(fan_in)
        return jax.random.uniform(k, (fan_in, fan_out),
                                  minval=-bound, maxval=bound, dtype=dtype)

    w1 = trunk_w(ks[0], state_dim, hidden_dim)
    b1 = jnp.full((hidden_dim,), 0.1, dtype)
    w2 = trunk_w(ks[1], hidden_dim, hidden_dim)
    b2 = jnp.full((hidden_dim,), 0.1, dtype)
    w3 = trunk_w(ks[2], hidden_dim, hidden_dim)
    b3 = jnp.full((hidden_dim,), 0.1, dtype)
    w_mu = jax.random.uniform(ks[3], (hidden_dim, action_dim), minval=-1e-3, maxval=1e-3, dtype=dtype)
    b_mu = jax.random.uniform(ks[4], (action_dim,), minval=-1e-3, maxval=1e-3, dtype=dtype)
    w_ls = jax.random.uniform(ks[5], (hidden_dim, action_dim), minval=-1e-3, maxval=1e-3, dtype=dtype)
    b_ls = jax.random.uniform(ks[6], (action_dim,), minval=-1e-3, maxval=1e-3, dtype=dtype)
    return (w1, b1, w2, b2, w3, b3, w_mu, b_mu, w_ls, b_ls)


def actor_forward_ref(params, state, *, noise, deterministic, max_action=1.0):
    w1, b1, w2, b2, w3, b3, w_mu, b_mu, w_ls, b_ls = params
    h = jax.nn.relu(state @ w1 + b1)
    h = jax.nn.relu(h @ w2 + b2)
    h = jax.nn.relu(h @ w3 + b3)
    mu = h @ w_mu + b_mu
    log_sigma = jnp.clip(h @ w_ls + b_ls, -5.0, 2.0)
    sigma = jnp.exp(log_sigma)
    action = mu if deterministic else mu + sigma * noise
    tanh_a = jnp.tanh(action)
    lp = -0.5 * ((action - mu) / sigma) ** 2 - log_sigma - _LOG_SQRT_2PI
    lp = lp - jnp.log(1.0 - tanh_a * tanh_a + 1e-6)
    return tanh_a * max_action, lp.sum(-1)


if __name__ == "__main__":
    state_dim, action_dim, hidden_dim = 17, 6, 32
    batch, max_action = 16, 1.0

    key = jax.random.PRNGKey(0)
    k_params, k_state, k_noise = jax.random.split(key, 3)
    params = init_actor_params(k_params, state_dim, action_dim, hidden_dim)
    state = jax.random.normal(k_state, (batch, state_dim), dtype=jnp.float32)
    # TODO(synk): torch Normal.rsample's internal RNG has no in-kernel equivalent;
    # standard-normal noise is drawn here and the reparameterization is fused in-kernel.
    noise = jax.random.normal(k_noise, (batch, action_dim), dtype=jnp.float32)

    # Deterministic path (Actor.act in eval mode).
    act_det, lp_det = actor_forward(params, state, noise=None,
                                    deterministic=True, max_action=max_action,
                                    batch_tile=8)
    act_det, lp_det = jax.block_until_ready((act_det, lp_det))
    ref_act_det, ref_lp_det = actor_forward_ref(
        params, state, noise=jnp.zeros((batch, action_dim)), deterministic=True,
        max_action=max_action)
    assert act_det.shape == (batch, action_dim)
    assert jnp.allclose(act_det, ref_act_det, atol=1e-5, rtol=1e-5), "action (det) mismatch"
    assert jnp.allclose(lp_det, ref_lp_det, atol=1e-4, rtol=1e-4), "log_prob (det) mismatch"

    # Stochastic path with log_prob (training-time forward).
    act_s, lp_s = actor_forward(params, state, noise=noise,
                                deterministic=False, max_action=max_action,
                                batch_tile=8)
    act_s, lp_s = jax.block_until_ready((act_s, lp_s))
    ref_act_s, ref_lp_s = actor_forward_ref(
        params, state, noise=noise, deterministic=False, max_action=max_action)
    assert jnp.allclose(act_s, ref_act_s, atol=1e-5, rtol=1e-5), "action (stoch) mismatch"
    assert jnp.allclose(lp_s, ref_lp_s, atol=1e-4, rtol=1e-4), "log_prob (stoch) mismatch"

    print("KERNEL_OK")
</pallas_src>

<mosaic_0001>
module attributes {stable_mosaic.version = 11 : i64} {
  func.func @_actor_kernel(%arg0: i32, %arg1: memref<8x128xf32, #tpu.memory_space<vmem>>, %arg2: memref<8x128xf32, #tpu.memory_space<vmem>>, %arg3: memref<128x128xf32, #tpu.memory_space<vmem>>, %arg4: memref<1x128xf32, #tpu.memory_space<vmem>>, %arg5: memref<128x128xf32, #tpu.memory_space<vmem>>, %arg6: memref<1x128xf32, #tpu.memory_space<vmem>>, %arg7: memref<128x128xf32, #tpu.memory_space<vmem>>, %arg8: memref<1x128xf32, #tpu.memory_space<vmem>>, %arg9: memref<128x128xf32, #tpu.memory_space<vmem>>, %arg10: memref<1x128xf32, #tpu.memory_space<vmem>>, %arg11: memref<128x128xf32, #tpu.memory_space<vmem>>, %arg12: memref<1x128xf32, #tpu.memory_space<vmem>>, %arg13: memref<8x128xf32, #tpu.memory_space<vmem>>, %arg14: memref<8x1xf32, #tpu.memory_space<vmem>>) attributes {dimension_semantics = [#tpu.dimension_semantics<parallel>], iteration_bounds = array<i64: 2>, scalar_prefetch = 0 : i64, scratch_operands = 0 : i64, tpu.core_type = #tpu.core_type<tc>, window_params = [{transform_indices = @transform_0, window_bounds = array<i64: 8, 128>}, {transform_indices = @transform_1, window_bounds = array<i64: 8, 128>}, {pipeline_mode = #tpu.pipeline_mode<synchronous>, transform_indices = @transform_2, window_bounds = array<i64: 128, 128>}, {pipeline_mode = #tpu.pipeline_mode<synchronous>, transform_indices = @transform_3, window_bounds = array<i64: 1, 128>}, {pipeline_mode = #tpu.pipeline_mode<synchronous>, transform_indices = @transform_4, window_bounds = array<i64: 128, 128>}, {pipeline_mode = #tpu.pipeline_mode<synchronous>, transform_indices = @transform_5, window_bounds = array<i64: 1, 128>}, {pipeline_mode = #tpu.pipeline_mode<synchronous>, transform_indices = @transform_6, window_bounds = array<i64: 128, 128>}, {pipeline_mode = #tpu.pipeline_mode<synchronous>, transform_indices = @transform_7, window_bounds = array<i64: 1, 128>}, {pipeline_mode = #tpu.pipeline_mode<synchronous>, transform_indices = @transform_8, window_bounds = array<i64: 128, 128>}, {pipeline_mode = #tpu.pipeline_mode<synchronous>, transform_indices = @transform_9, window_bounds = array<i64: 1, 128>}, {pipeline_mode = #tpu.pipeline_mode<synchronous>, transform_indices = @transform_10, window_bounds = array<i64: 128, 128>}, {pipeline_mode = #tpu.pipeline_mode<synchronous>, transform_indices = @transform_11, window_bounds = array<i64: 1, 128>}, {transform_indices = @transform_12, window_bounds = array<i64: 8, 128>}, {transform_indices = @transform_13, window_bounds = array<i64: 8, 1>}]} {
    %c0 = arith.constant 0 : index
    %c0_0 = arith.constant 0 : index
    %0 = vector.load %arg1[%c0, %c0_0] : memref<8x128xf32, #tpu.memory_space<vmem>>, vector<8x128xf32>
    %c0_1 = arith.constant 0 : index
    %c0_2 = arith.constant 0 : index
    %1 = vector.load %arg3[%c0_1, %c0_2] : memref<128x128xf32, #tpu.memory_space<vmem>>, vector<128x128xf32>
    %cst = arith.constant dense<0.000000e+00> : vector<8x128xf32>
    %2 = tpu.matmul %0, %1, %cst {dimension_numbers = #tpu.dot_dimension_numbers<[1], [0], [0], [1], [0, 0, 1, 1], [], []>} : vector<8x128xf32>, vector<128x128xf32>, vector<8x128xf32> -> vector<8x128xf32>
    %c0_3 = arith.constant 0 : index
    %c0_4 = arith.constant 0 : index
    %3 = vector.load %arg4[%c0_3, %c0_4] : memref<1x128xf32, #tpu.memory_space<vmem>>, vector<1x128xf32>
    %4 = vector.broadcast %3 : vector<1x128xf32> to vector<8x128xf32>
    %5 = arith.addf %2, %4 : vector<8x128xf32>
    %cst_5 = arith.constant 0.000000e+00 : f32
    %6 = vector.broadcast %cst_5 : f32 to vector<8x128xf32>
    %7 = arith.maximumf %5, %6 : vector<8x128xf32>
    %c0_6 = arith.constant 0 : index
    %c0_7 = arith.constant 0 : index
    %8 = vector.load %arg5[%c0_6, %c0_7] : memref<128x128xf32, #tpu.memory_space<vmem>>, vector<128x128xf32>
    %cst_8 = arith.constant dense<0.000000e+00> : vector<8x128xf32>
    %9 = tpu.matmul %7, %8, %cst_8 {dimension_numbers = #tpu.dot_dimension_numbers<[1], [0], [0], [1], [0, 0, 1, 1], [], []>} : vector<8x128xf32>, vector<128x128xf32>, vector<8x128xf32> -> vector<8x128xf32>
    %c0_9 = arith.constant 0 : index
    %c0_10 = arith.constant 0 : index
    %10 = vector.load %arg6[%c0_9, %c0_10] : memref<1x128xf32, #tpu.memory_space<vmem>>, vector<1x128xf32>
    %11 = vector.broadcast %10 : vector<1x128xf32> to vector<8x128xf32>
    %12 = arith.addf %9, %11 : vector<8x128xf32>
    %cst_11 = arith.constant 0.000000e+00 : f32
    %13 = vector.broadcast %cst_11 : f32 to vector<8x128xf32>
    %14 = arith.maximumf %12, %13 : vector<8x128xf32>
    %c0_12 = arith.constant 0 : index
    %c0_13 = arith.constant 0 : index
    %15 = vector.load %arg7[%c0_12, %c0_13] : memref<128x128xf32, #tpu.memory_space<vmem>>, vector<128x128xf32>
    %cst_14 = arith.constant dense<0.000000e+00> : vector<8x128xf32>
    %16 = tpu.matmul %14, %15, %cst_14 {dimension_numbers = #tpu.dot_dimension_numbers<[1], [0], [0], [1], [0, 0, 1, 1], [], []>} : vector<8x128xf32>, vector<128x128xf32>, vector<8x128xf32> -> vector<8x128xf32>
    %c0_15 = arith.constant 0 : index
    %c0_16 = arith.constant 0 : index
    %17 = vector.load %arg8[%c0_15, %c0_16] : memref<1x128xf32, #tpu.memory_space<vmem>>, vector<1x128xf32>
    %18 = vector.broadcast %17 : vector<1x128xf32> to vector<8x128xf32>
    %19 = arith.addf %16, %18 : vector<8x128xf32>
    %cst_17 = arith.constant 0.000000e+00 : f32
    %20 = vector.broadcast %cst_17 : f32 to vector<8x128xf32>
    %21 = arith.maximumf %19, %20 : vector<8x128xf32>
    %c0_18 = arith.constant 0 : index
    %c0_19 = arith.constant 0 : index
    %22 = vector.load %arg9[%c0_18, %c0_19] : memref<128x128xf32, #tpu.memory_space<vmem>>, vector<128x128xf32>
    %cst_20 = arith.constant dense<0.000000e+00> : vector<8x128xf32>
    %23 = tpu.matmul %21, %22, %cst_20 {dimension_numbers = #tpu.dot_dimension_numbers<[1], [0], [0], [1], [0, 0, 1, 1], [], []>} : vector<8x128xf32>, vector<128x128xf32>, vector<8x128xf32> -> vector<8x128xf32>
    %c0_21 = arith.constant 0 : index
    %c0_22 = arith.constant 0 : index
    %24 = vector.load %arg10[%c0_21, %c0_22] : memref<1x128xf32, #tpu.memory_space<vmem>>, vector<1x128xf32>
    %25 = vector.broadcast %24 : vector<1x128xf32> to vector<8x128xf32>
    %26 = arith.addf %23, %25 : vector<8x128xf32>
    %c0_23 = arith.constant 0 : index
    %c0_24 = arith.constant 0 : index
    %27 = vector.load %arg11[%c0_23, %c0_24] : memref<128x128xf32, #tpu.memory_space<vmem>>, vector<128x128xf32>
    %cst_25 = arith.constant dense<0.000000e+00> : vector<8x128xf32>
    %28 = tpu.matmul %21, %27, %cst_25 {dimension_numbers = #tpu.dot_dimension_numbers<[1], [0], [0], [1], [0, 0, 1, 1], [], []>} : vector<8x128xf32>, vector<128x128xf32>, vector<8x128xf32> -> vector<8x128xf32>
    %c0_26 = arith.constant 0 : index
    %c0_27 = arith.constant 0 : index
    %29 = vector.load %arg12[%c0_26, %c0_27] : memref<1x128xf32, #tpu.memory_space<vmem>>, vector<1x128xf32>
    %30 = vector.broadcast %29 : vector<1x128xf32> to vector<8x128xf32>
    %31 = arith.addf %28, %30 : vector<8x128xf32>
    %cst_28 = arith.constant -5.000000e+00 : f32
    %cst_29 = arith.constant 2.000000e+00 : f32
    %32 = vector.broadcast %cst_28 : f32 to vector<8x128xf32>
    %33 = arith.maximumf %32, %31 : vector<8x128xf32>
    %34 = vector.broadcast %cst_29 : f32 to vector<8x128xf32>
    %35 = arith.minimumf %34, %33 : vector<8x128xf32>
    %36 = math.exp %35 : vector<8x128xf32>
    %37 = math.tanh %26 : vector<8x128xf32>
    %cst_30 = arith.constant 1.000000e+00 : f32
    %38 = vector.broadcast %cst_30 : f32 to vector<8x128xf32>
    %39 = arith.mulf %37, %38 : vector<8x128xf32>
    %c0_31 = arith.constant 0 : index
    %c0_32 = arith.constant 0 : index
    %40 = vector.load %arg13[%c0_31, %c0_32] : memref<8x128xf32, #tpu.memory_space<vmem>>, vector<8x128xf32>
    tpu.vector_store %arg13[%c0_31, %c0_32], %39 {strides = array<i32>} : memref<8x128xf32, #tpu.memory_space<vmem>>, vector<8x128xf32>,
    %41 = arith.subf %26, %26 : vector<8x128xf32>
    %42 = arith.divf %41, %36 : vector<8x128xf32>
    %cst_33 = arith.constant -5.000000e-01 : f32
    %43 = vector.broadcast %cst_33 : f32 to vector<8x128xf32>
    %44 = arith.mulf %43, %42 : vector<8x128xf32>
    %45 = arith.mulf %44, %42 : vector<8x128xf32>
    %46 = arith.subf %45, %35 : vector<8x128xf32>
    %cst_34 = arith.constant 0.918938517 : f32
    %47 = vector.broadcast %cst_34 : f32 to vector<8x128xf32>
    %48 = arith.subf %46, %47 : vector<8x128xf32>
    %49 = arith.mulf %37, %37 : vector<8x128xf32>
    %cst_35 = arith.constant 1.000000e+00 : f32
    %50 = vector.broadcast %cst_35 : f32 to vector<8x128xf32>
    %51 = arith.subf %50, %49 : vector<8x128xf32>
    %cst_36 = arith.constant 9.99999997E-7 : f32
    %52 = vector.broadcast %cst_36 : f32 to vector<8x128xf32>
    %53 = arith.addf %51, %52 : vector<8x128xf32>
    %54 = math.log %53 : vector<8x128xf32>
    %55 = arith.subf %48, %54 : vector<8x128xf32>
    %56 = tpu.iota {dimensions = array<i32: 1>} : vector<8x128xi32>
    %c6_i32 = arith.constant 6 : i32
    %57 = vector.broadcast %c6_i32 : i32 to vector<8x128xi32>
    %58 = arith.cmpi slt, %56, %57 : vector<8x128xi32>
    %cst_37 = arith.constant 0.000000e+00 : f32
    %59 = vector.broadcast %cst_37 : f32 to vector<8x128xf32>
    %60 = arith.select %58, %55, %59 : vector<8x128xi1>, vector<8x128xf32>
    %cst_38 = arith.constant dense<0.000000e+00> : vector<8xf32>
    %61 = vector.multi_reduction <add>, %60, %cst_38 [1] : vector<8x128xf32> to vector<8xf32>
    %62 = vector.shape_cast %61 : vector<8xf32> to vector<8x1xf32>
    %c0_39 = arith.constant 0 : index
    %c0_40 = arith.constant 0 : index
    %63 = vector.load %arg14[%c0_39, %c0_40] : memref<8x1xf32, #tpu.memory_space<vmem>>, vector<8x1xf32>
    tpu.vector_store %arg14[%c0_39, %c0_40], %62 {strides = array<i32>} : memref<8x1xf32, #tpu.memory_space<vmem>>, vector<8x1xf32>,
    return
  }
  func.func @transform_0(%arg0: i32) -> (i32, i32) {
    %c0_i32 = arith.constant 0 : i32
    %c0_i32_0 = arith.constant 0 : i32
    return %arg0, %c0_i32 : i32, i32
  }
  func.func @transform_1(%arg0: i32) -> (i32, i32) {
    %c0_i32 = arith.constant 0 : i32
    %c0_i32_0 = arith.constant 0 : i32
    return %arg0, %c0_i32 : i32, i32
  }
  func.func @transform_2(%arg0: i32) -> (i32, i32) {
    %c0_i32 = arith.constant 0 : i32
    %c0_i32_0 = arith.constant 0 : i32
    %c0_i32_1 = arith.constant 0 : i32
    return %c0_i32, %c0_i32_0 : i32, i32
  }
  func.func @transform_3(%arg0: i32) -> (i32, i32) {
    %c0_i32 = arith.constant 0 : i32
    %c0_i32_0 = arith.constant 0 : i32
    %c0_i32_1 = arith.constant 0 : i32
    return %c0_i32, %c0_i32_0 : i32, i32
  }
  func.func @transform_4(%arg0: i32) -> (i32, i32) {
    %c0_i32 = arith.constant 0 : i32
    %c0_i32_0 = arith.constant 0 : i32
    %c0_i32_1 = arith.constant 0 : i32
    return %c0_i32, %c0_i32_0 : i32, i32
  }
  func.func @transform_5(%arg0: i32) -> (i32, i32) {
    %c0_i32 = arith.constant 0 : i32
    %c0_i32_0 = arith.constant 0 : i32
    %c0_i32_1 = arith.constant 0 : i32
    return %c0_i32, %c0_i32_0 : i32, i32
  }
  func.func @transform_6(%arg0: i32) -> (i32, i32) {
    %c0_i32 = arith.constant 0 : i32
    %c0_i32_0 = arith.constant 0 : i32
    %c0_i32_1 = arith.constant 0 : i32
    return %c0_i32, %c0_i32_0 : i32, i32
  }
  func.func @transform_7(%arg0: i32) -> (i32, i32) {
    %c0_i32 = arith.constant 0 : i32
    %c0_i32_0 = arith.constant 0 : i32
    %c0_i32_1 = arith.constant 0 : i32
    return %c0_i32, %c0_i32_0 : i32, i32
  }
  func.func @transform_8(%arg0: i32) -> (i32, i32) {
    %c0_i32 = arith.constant 0 : i32
    %c0_i32_0 = arith.constant 0 : i32
    %c0_i32_1 = arith.constant 0 : i32
    return %c0_i32, %c0_i32_0 : i32, i32
  }
  func.func @transform_9(%arg0: i32) -> (i32, i32) {
    %c0_i32 = arith.constant 0 : i32
    %c0_i32_0 = arith.constant 0 : i32
    %c0_i32_1 = arith.constant 0 : i32
    return %c0_i32, %c0_i32_0 : i32, i32
  }
  func.func @transform_10(%arg0: i32) -> (i32, i32) {
    %c0_i32 = arith.constant 0 : i32
    %c0_i32_0 = arith.constant 0 : i32
    %c0_i32_1 = arith.constant 0 : i32
    return %c0_i32, %c0_i32_0 : i32, i32
  }
  func.func @transform_11(%arg0: i32) -> (i32, i32) {
    %c0_i32 = arith.constant 0 : i32
    %c0_i32_0 = arith.constant 0 : i32
    %c0_i32_1 = arith.constant 0 : i32
    return %c0_i32, %c0_i32_0 : i32, i32
  }
  func.func @transform_12(%arg0: i32) -> (i32, i32) {
    %c0_i32 = arith.constant 0 : i32
    %c0_i32_0 = arith.constant 0 : i32
    return %arg0, %c0_i32 : i32, i32
  }
  func.func @transform_13(%arg0: i32) -> (i32, i32) {
    %c0_i32 = arith.constant 0 : i32
    %c0_i32_0 = arith.constant 0 : i32
    return %arg0, %c0_i32 : i32, i32
  }
}

</mosaic_0001>

<llo_original>
// kernel: tpu_custom_call.1
$region0: #{tpu_custom_call.1}
  #allocation0 [shape = 'u32[]', space=smem, size = 0x4, offset = 0x4, fixed_abs, tag = 'smem constant byte address 0x4 - core index']
  #allocation1 [shape = 'u32[72,128]{1,0:T(1,128)}', space=vmem, size = 0x9000, scoped, tag = 'internal scratch']
  %s0 = inlined_call_operand.hbm [shape: f32[16,128], index: 0, kind: input, shape index: {}]
  %s1 = inlined_call_operand.hbm [shape: f32[16,128], index: 1, kind: input, shape index: {}]
  %s2 = inlined_call_operand.hbm [shape: f32[128,128], index: 2, kind: input, shape index: {}]
  %s3 = inlined_call_operand.vmem [shape: f32[1,128], index: 3, kind: input, shape index: {}]
  %s4 = inlined_call_operand.hbm [shape: f32[128,128], index: 4, kind: input, shape index: {}]
  %s5 = inlined_call_operand.vmem [shape: f32[1,128], index: 5, kind: input, shape index: {}]
  %s6 = inlined_call_operand.hbm [shape: f32[128,128], index: 6, kind: input, shape index: {}]
  %s7 = inlined_call_operand.vmem [shape: f32[1,128], index: 7, kind: input, shape index: {}]
  %s8 = inlined_call_operand.hbm [shape: f32[128,128], index: 8, kind: input, shape index: {}]
  %s9 = inlined_call_operand.vmem [shape: f32[1,128], index: 9, kind: input, shape index: {}]
  %s10 = inlined_call_operand.hbm [shape: f32[128,128], index: 10, kind: input, shape index: {}]
  %s11 = inlined_call_operand.vmem [shape: f32[1,128], index: 11, kind: input, shape index: {}]
  %s12 = inlined_call_operand.hbm [shape: f32[16,128], index: 12, kind: output, shape index: {0}]
  %s13 = inlined_call_operand.vmem [shape: f32[16,1], index: 13, kind: output, shape index: {1}]
  %14 = xla_tuple %s12, %s13
  %s15 = sld [smem:[#allocation0]]
  $region117: #{tpu_custom_call.1} parent=0
    _
  %s17 = ssub.s32 1, %s15
  %s18 = scalar_select 0, %s17, %s15
  $region1: #{tpu_custom_call.1} parent=0
    #allocation2 [shape = 'u8[8192]{0}', space=vmem, size = 0x2000, scoped, tag = 'input window, operand 0']
    #allocation3 [shape = 's32[2]{0}', space=sflag, size = 0x8, scoped, tag = 'scoped memory for tpu_custom_call.1']
    #allocation4 [shape = 's32[2]{0}', space=sflag, size = 0x8, scoped, tag = 'scoped memory for tpu_custom_call.1']
    #allocation5 [shape = 'u8[8192]{0}', space=vmem, size = 0x2000, scoped, tag = 'input window, operand 1']
    #allocation6 [shape = 's32[2]{0}', space=sflag, size = 0x8, scoped, tag = 'scoped memory for tpu_custom_call.1']
    #allocation7 [shape = 'u8[65536]{0}', space=vmem, size = 0x10000, scoped, tag = 'input window, operand 2, single buffered']
    #allocation8 [shape = 'u8[65536]{0}', space=vmem, size = 0x10000, scoped, tag = 'input window, operand 4, single buffered']
    #allocation9 [shape = 's32[1]{0}', space=sflag, size = 0x4, scoped, tag = 'scoped memory for tpu_custom_call.1']
    #allocation10 [shape = 'u8[65536]{0}', space=vmem, size = 0x10000, scoped, tag = 'input window, operand 6, single buffered']
    #allocation11 [shape = 'u8[65536]{0}', space=vmem, size = 0x10000, scoped, tag = 'input window, operand 8, single buffered']
    #allocation12 [shape = 's32[1]{0}', space=sflag, size = 0x4, scoped, tag = 'scoped memory for tpu_custom_call.1']
    #allocation13 [shape = 'u8[65536]{0}', space=vmem, size = 0x10000, scoped, tag = 'input window, operand 10, single buffered']
    #allocation14 [shape = 'u8[8192]{0}', space=vmem, size = 0x2000, scoped, tag = 'output window, operand 0']
    %19 = vsyncpa [#allocation3], 0
    %s20 = scalar_lea.sflag [#allocation3], 1
    %21 = vsyncpa %s20, 0
    %22 = vsyncpa [#allocation6], 0
    %s23 = scalar_lea.sflag [#allocation6], 1
    %24 = vsyncpa %s23, 0
    %25 = vsyncpa [#allocation9], 0
    %26 = vsyncpa [#allocation12], 0
    %27 = vsyncpa [#allocation4], 0
    %s28 = scalar_lea.sflag [#allocation4], 1
    %29 = vsyncpa %s28, 0
    loop: start=0, step=1, limit=4
    $region2: #{tpu_custom_call.1} parent=1 // loop_pre_header
      _
    $region3: #{tpu_custom_call.1} parent=1 // loop_header
      %s31 = sphi 0, %s35
      %p32 = scmp.ge.s32.totalorder %s31, 4
      %s41 = sphi 0, %s43
      %s44 = sphi 0, %s41
      %s45 = sphi 0, %s44
      %s61 = sphi 0, %s45
      %s67 = sphi 0, %s69
      %s70 = sphi 0, %s67
      %s71 = sphi 0, %s70
      %s87 = sphi 0, %s71
      %s91 = sphi 0, %s91
      %s93 = sphi 0, %s91
      %s94 = sphi 0, %s93
      %s108 = sphi 0, %s94
      %s112 = sphi 0, %s112
      %s114 = sphi 0, %s112
      %s115 = sphi 0, %s114
      %s129 = sphi 0, %s115
      %s133 = sphi 0, %s133
      %s135 = sphi 0, %s133
      %s136 = sphi 0, %s135
      %s150 = sphi 0, %s136
      %s154 = sphi 0, %s154
      %s156 = sphi 0, %s154
      %s157 = sphi 0, %s156
      %s171 = sphi 0, %s157
      %s175 = sphi 0, %s175
      %s177 = sphi 0, %s175
      %s178 = sphi 0, %s177
      %s192 = sphi 0, %s178
      %s196 = sphi 0, %s196
      %s198 = sphi 0, %s196
      %s199 = sphi 0, %s198
      %s213 = sphi 0, %s199
      %s217 = sphi 0, %s217
      %s219 = sphi 0, %s217
      %s220 = sphi 0, %s219
      %s234 = sphi 0, %s220
      %s238 = sphi 0, %s238
      %s240 = sphi 0, %s238
      %s241 = sphi 0, %s240
      %s255 = sphi 0, %s241
      %s259 = sphi 0, %s259
      %s261 = sphi 0, %s259
      %s262 = sphi 0, %s261
      %s276 = sphi 0, %s262
      %s280 = sphi 0, %s280
      %s282 = sphi 0, %s280
      %s283 = sphi 0, %s282
      %s297 = sphi 0, %s283
      %s303 = sphi 0, %s305
      %s306 = sphi 0, %s303
      %s307 = sphi 0, %s306
      %s323 = sphi 0, %s307
      %s329 = sphi 0, %s331
      %s332 = sphi 0, %s329
      %s333 = sphi 0, %s332
      %s349 = sphi 0, %s333
    $region4: #{tpu_custom_call.1} parent=1 // loop_header_branch
      %34 = sbr.rel (%p32) target = $region8
    $region5: #{tpu_custom_call.1} parent=1 // loop_body
      %s36 = ssub.s32 %s31, 1
      %s37 = ssub.s32 %s31, 2
      %s38 = sadd.s32 %s31, 1
      %s39 = ssub.s32 %s31, %s38
      %p40 = scmp.eq.s32.totalorder %s39, 0
      %s42 = sadd.s32 %s41, 1
      %s43 = scalar_select %p40, %s41, %s42
      %p46 = pneg %p40
      %p47 = scmp.eq.s32.totalorder %s31, 1
      %p48 = por %p46, %p47
      %p49 = scmp.ne.s32.totalorder %s41, %s44
      %p50 = scmp.eq.s32.totalorder %s31, 0
      %p51 = por %p49, %p50
      %p52 = scmp.ne.s32.totalorder %s41, %s44
      %p53 = scmp.eq.s32.totalorder %s36, 1
      %p54 = por %p52, %p53
      %p55 = scmp.ne.s32.totalorder %s44, %s45
      %p56 = scmp.eq.s32.totalorder %s36, 0
      %p57 = por %p55, %p56
      %p58 = scmp.ne.s32.totalorder %s44, %s45
      %p59 = scmp.eq.s32.totalorder %s37, 1
      %p60 = por %p58, %p59
      %p62 = scmp.ne.s32.totalorder %s45, %s61
      %p63 = scmp.eq.s32.totalorder %s37, 0
      %p64 = por %p62, %p63
      %s65 = ssub.s32 %s31, %s38
      %p66 = scmp.eq.s32.totalorder %s65, 0
      %s68 = sadd.s32 %s67, 1
      %s69 = scalar_select %p66, %s67, %s68
      %p72 = pneg %p66
      %p73 = scmp.eq.s32.totalorder %s31, 1
      %p74 = por %p72, %p73
      %p75 = scmp.ne.s32.totalorder %s67, %s70
      %p76 = scmp.eq.s32.totalorder %s31, 0
      %p77 = por %p75, %p76
      %p78 = scmp.ne.s32.totalorder %s67, %s70
      %p79 = scmp.eq.s32.totalorder %s36, 1
      %p80 = por %p78, %p79
      %p81 = scmp.ne.s32.totalorder %s70, %s71
      %p82 = scmp.eq.s32.totalorder %s36, 0
      %p83 = por %p81, %p82
      %p84 = scmp.ne.s32.totalorder %s70, %s71
      %p85 = scmp.eq.s32.totalorder %s37, 1
      %p86 = por %p84, %p85
      %p88 = scmp.ne.s32.totalorder %s71, %s87
      %p89 = scmp.eq.s32.totalorder %s37, 0
      %p90 = por %p88, %p89
      %s92 = sadd.s32 %s91, 1
      %p95 = scmp.eq.s32.totalorder %s31, 1
      %p96 = scmp.ne.s32.totalorder %s91, %s93
      %p97 = scmp.eq.s32.totalorder %s31, 0
      %p98 = por %p96, %p97
      %p99 = scmp.ne.s32.totalorder %s91, %s93
      %p100 = scmp.eq.s32.totalorder %s36, 1
      %p101 = por %p99, %p100
      %p102 = scmp.ne.s32.totalorder %s93, %s94
      %p103 = scmp.eq.s32.totalorder %s36, 0
      %p104 = por %p102, %p103
      %p105 = scmp.ne.s32.totalorder %s93, %s94
      %p106 = scmp.eq.s32.totalorder %s37, 1
      %p107 = por %p105, %p106
      %p109 = scmp.ne.s32.totalorder %s94, %s108
      %p110 = scmp.eq.s32.totalorder %s37, 0
      %p111 = por %p109, %p110
      %s113 = sadd.s32 %s112, 1
      %p116 = scmp.eq.s32.totalorder %s31, 1
      %p117 = scmp.ne.s32.totalorder %s112, %s114
      %p118 = scmp.eq.s32.totalorder %s31, 0
      %p119 = por %p117, %p118
      %p120 = scmp.ne.s32.totalorder %s112, %s114
      %p121 = scmp.eq.s32.totalorder %s36, 1
      %p122 = por %p120, %p121
      %p123 = scmp.ne.s32.totalorder %s114, %s115
      %p124 = scmp.eq.s32.totalorder %s36, 0
      %p125 = por %p123, %p124
      %p126 = scmp.ne.s32.totalorder %s114, %s115
      %p127 = scmp.eq.s32.totalorder %s37, 1
      %p128 = por %p126, %p127
      %p130 = scmp.ne.s32.totalorder %s115, %s129
      %p131 = scmp.eq.s32.totalorder %s37, 0
      %p132 = por %p130, %p131
      %s134 = sadd.s32 %s133, 1
      %p137 = scmp.eq.s32.totalorder %s31, 1
      %p138 = scmp.ne.s32.totalorder %s133, %s135
      %p139 = scmp.eq.s32.totalorder %s31, 0
      %p140 = por %p138, %p139
      %p141 = scmp.ne.s32.totalorder %s133, %s135
      %p142 = scmp.eq.s32.totalorder %s36, 1
      %p143 = por %p141, %p142
      %p144 = scmp.ne.s32.totalorder %s135, %s136
      %p145 = scmp.eq.s32.totalorder %s36, 0
      %p146 = por %p144, %p145
      %p147 = scmp.ne.s32.totalorder %s135, %s136
      %p148 = scmp.eq.s32.totalorder %s37, 1
      %p149 = por %p147, %p148
      %p151 = scmp.ne.s32.totalorder %s136, %s150
      %p152 = scmp.eq.s32.totalorder %s37, 0
      %p153 = por %p151, %p152
      %s155 = sadd.s32 %s154, 1
      %p158 = scmp.eq.s32.totalorder %s31, 1
      %p159 = scmp.ne.s32.totalorder %s154, %s156
      %p160 = scmp.eq.s32.totalorder %s31, 0
      %p161 = por %p159, %p160
      %p162 = scmp.ne.s32.totalorder %s154, %s156
      %p163 = scmp.eq.s32.totalorder %s36, 1
      %p164 = por %p162, %p163
      %p165 = scmp.ne.s32.totalorder %s156, %s157
      %p166 = scmp.eq.s32.totalorder %s36, 0
      %p167 = por %p165, %p166
      %p168 = scmp.ne.s32.totalorder %s156, %s157
      %p169 = scmp.eq.s32.totalorder %s37, 1
      %p170 = por %p168, %p169
      %p172 = scmp.ne.s32.totalorder %s157, %s171
      %p173 = scmp.eq.s32.totalorder %s37, 0
      %p174 = por %p172, %p173
      %s176 = sadd.s32 %s175, 1
      %p179 = scmp.eq.s32.totalorder %s31, 1
      %p180 = scmp.ne.s32.totalorder %s175, %s177
      %p181 = scmp.eq.s32.totalorder %s31, 0
      %p182 = por %p180, %p181
      %p183 = scmp.ne.s32.totalorder %s175, %s177
      %p184 = scmp.eq.s32.totalorder %s36, 1
      %p185 = por %p183, %p184
      %p186 = scmp.ne.s32.totalorder %s177, %s178
      %p187 = scmp.eq.s32.totalorder %s36, 0
      %p188 = por %p186, %p187
      %p189 = scmp.ne.s32.totalorder %s177, %s178
      %p190 = scmp.eq.s32.totalorder %s37, 1
      %p191 = por %p189, %p190
      %p193 = scmp.ne.s32.totalorder %s178, %s192
      %p194 = scmp.eq.s32.totalorder %s37, 0
      %p195 = por %p193, %p194
      %s197 = sadd.s32 %s196, 1
      %p200 = scmp.eq.s32.totalorder %s31, 1
      %p201 = scmp.ne.s32.totalorder %s196, %s198
      %p202 = scmp.eq.s32.totalorder %s31, 0
      %p203 = por %p201, %p202
      %p204 = scmp.ne.s32.totalorder %s196, %s198
      %p205 = scmp.eq.s32.totalorder %s36, 1
      %p206 = por %p204, %p205
      %p207 = scmp.ne.s32.totalorder %s198, %s199
      %p208 = scmp.eq.s32.totalorder %s36, 0
      %p209 = por %p207, %p208
      %p210 = scmp.ne.s32.totalorder %s198, %s199
      %p211 = scmp.eq.s32.totalorder %s37, 1
      %p212 = por %p210, %p211
      %p214 = scmp.ne.s32.totalorder %s199, %s213
      %p215 = scmp.eq.s32.totalorder %s37, 0
      %p216 = por %p214, %p215
      %s218 = sadd.s32 %s217, 1
      %p221 = scmp.eq.s32.totalorder %s31, 1
      %p222 = scmp.ne.s32.totalorder %s217, %s219
      %p223 = scmp.eq.s32.totalorder %s31, 0
      %p224 = por %p222, %p223
      %p225 = scmp.ne.s32.totalorder %s217, %s219
      %p226 = scmp.eq.s32.totalorder %s36, 1
      %p227 = por %p225, %p226
      %p228 = scmp.ne.s32.totalorder %s219, %s220
      %p229 = scmp.eq.s32.totalorder %s36, 0
      %p230 = por %p228, %p229
      %p231 = scmp.ne.s32.totalorder %s219, %s220
      %p232 = scmp.eq.s32.totalorder %s37, 1
      %p233 = por %p231, %p232
      %p235 = scmp.ne.s32.totalorder %s220, %s234
      %p236 = scmp.eq.s32.totalorder %s37, 0
      %p237 = por %p235, %p236
      %s239 = sadd.s32 %s238, 1
      %p242 = scmp.eq.s32.totalorder %s31, 1
      %p243 = scmp.ne.s32.totalorder %s238, %s240
      %p244 = scmp.eq.s32.totalorder %s31, 0
      %p245 = por %p243, %p244
      %p246 = scmp.ne.s32.totalorder %s238, %s240
      %p247 = scmp.eq.s32.totalorder %s36, 1
      %p248 = por %p246, %p247
      %p249 = scmp.ne.s32.totalorder %s240, %s241
      %p250 = scmp.eq.s32.totalorder %s36, 0
      %p251 = por %p249, %p250
      %p252 = scmp.ne.s32.totalorder %s240, %s241
      %p253 = scmp.eq.s32.totalorder %s37, 1
      %p254 = por %p252, %p253
      %p256 = scmp.ne.s32.totalorder %s241, %s255
      %p257 = scmp.eq.s32.totalorder %s37, 0
      %p258 = por %p256, %p257
      %s260 = sadd.s32 %s259, 1
      %p263 = scmp.eq.s32.totalorder %s31, 1
      %p264 = scmp.ne.s32.totalorder %s259, %s261
      %p265 = scmp.eq.s32.totalorder %s31, 0
      %p266 = por %p264, %p265
      %p267 = scmp.ne.s32.totalorder %s259, %s261
      %p268 = scmp.eq.s32.totalorder %s36, 1
      %p269 = por %p267, %p268
      %p270 = scmp.ne.s32.totalorder %s261, %s262
      %p271 = scmp.eq.s32.totalorder %s36, 0
      %p272 = por %p270, %p271
      %p273 = scmp.ne.s32.totalorder %s261, %s262
      %p274 = scmp.eq.s32.totalorder %s37, 1
      %p275 = por %p273, %p274
      %p277 = scmp.ne.s32.totalorder %s262, %s276
      %p278 = scmp.eq.s32.totalorder %s37, 0
      %p279 = por %p277, %p278
      %s281 = sadd.s32 %s280, 1
      %p284 = scmp.eq.s32.totalorder %s31, 1
      %p285 = scmp.ne.s32.totalorder %s280, %s282
      %p286 = scmp.eq.s32.totalorder %s31, 0
      %p287 = por %p285, %p286
      %p288 = scmp.ne.s32.totalorder %s280, %s282
      %p289 = scmp.eq.s32.totalorder %s36, 1
      %p290 = por %p288, %p289
      %p291 = scmp.ne.s32.totalorder %s282, %s283
      %p292 = scmp.eq.s32.totalorder %s36, 0
      %p293 = por %p291, %p292
      %p294 = scmp.ne.s32.totalorder %s282, %s283
      %p295 = scmp.eq.s32.totalorder %s37, 1
      %p296 = por %p294, %p295
      %p298 = scmp.ne.s32.totalorder %s283, %s297
      %p299 = scmp.eq.s32.totalorder %s37, 0
      %p300 = por %p298, %p299
      %s301 = ssub.s32 %s31, %s38
      %p302 = scmp.eq.s32.totalorder %s301, 0
      %s304 = sadd.s32 %s303, 1
      %s305 = scalar_select %p302, %s303, %s304
      %p308 = pneg %p302
      %p309 = scmp.eq.s32.totalorder %s31, 1
      %p310 = por %p308, %p309
      %p311 = scmp.ne.s32.totalorder %s303, %s306
      %p312 = scmp.eq.s32.totalorder %s31, 0
      %p313 = por %p311, %p312
      %p314 = scmp.ne.s32.totalorder %s303, %s306
      %p315 = scmp.eq.s32.totalorder %s36, 1
      %p316 = por %p314, %p315
      %p317 = scmp.ne.s32.totalorder %s306, %s307
      %p318 = scmp.eq.s32.totalorder %s36, 0
      %p319 = por %p317, %p318
      %p320 = scmp.ne.s32.totalorder %s306, %s307
      %p321 = scmp.eq.s32.totalorder %s37, 1
      %p322 = por %p320, %p321
      %p324 = scmp.ne.s32.totalorder %s307, %s323
      %p325 = scmp.eq.s32.totalorder %s37, 0
      %p326 = por %p324, %p325
      %s327 = ssub.s32 %s31, %s38
      %p328 = scmp.eq.s32.totalorder %s327, 0
      %s330 = sadd.s32 %s329, 1
      %s331 = scalar_select %p328, %s329, %s330
      %p334 = pneg %p328
      %p335 = scmp.eq.s32.totalorder %s31, 1
      %p336 = por %p334, %p335
      %p337 = scmp.ne.s32.totalorder %s329, %s332
      %p338 = scmp.eq.s32.totalorder %s31, 0
      %p339 = por %p337, %p338
      %p340 = scmp.ne.s32.totalorder %s329, %s332
      %p341 = scmp.eq.s32.totalorder %s36, 1
      %p342 = por %p340, %p341
      %p343 = scmp.ne.s32.totalorder %s332, %s333
      %p344 = scmp.eq.s32.totalorder %s36, 0
      %p345 = por %p343, %p344
      %p346 = scmp.ne.s32.totalorder %s332, %s333
      %p347 = scmp.eq.s32.totalorder %s37, 1
      %p348 = por %p346, %p347
      %p350 = scmp.ne.s32.totalorder %s333, %s349
      %p351 = scmp.eq.s32.totalorder %s37, 0
      %p352 = por %p350, %p351
      %p353 = scmp.le.s32.totalorder 1, %s31
      %p354 = scmp.lt.s32.totalorder %s31, 3
      %p355 = pnand %p353, %p354
      %p356 = pneg %p355
      // Predicated region
      $region9: #{tpu_custom_call.1} parent=5 // pred_check
        _
      $region10: #{tpu_custom_call.1} parent=5 // pred_check_branch
        %358 = sbr.rel (%p355) target = $region12
      $region11: #{tpu_custom_call.1} parent=5 // pred_region
        %s359 = ssub.s32 %s31, 1
        // Predicated region
        $region13: #{tpu_custom_call.1} parent=11 // pred_check
          %p360 = pneg %p104
        $region14: #{tpu_custom_call.1} parent=11 // pred_check_branch
          %362 = sbr.rel (%p360) target = $region16
        $region15: #{tpu_custom_call.1} parent=11 // pred_region
          %364 = vsyncadd [#allocation6], 0
          %s365 = sshll.u32 %s2, 4
          %s366 = int_to_ptr.hbm [resolvable:$true] %s365
          %s367 = sshll.u32 [#allocation7], 4
          %s368 = int_to_ptr.vmem [resolvable:$true] %s367
          %373 = dma.hbm_to_vmem [thread:$0]  %s366, 2048, %s368, [#allocation6], 128, 128, 8
        $region16: #{tpu_custom_call.1} parent=11 // pred_fallthru
          _
        // Predicated region
        $region17: #{tpu_custom_call.1} parent=11 // pred_check
          %p374 = pneg %p125
        $region18: #{tpu_custom_call.1} parent=11 // pred_check_branch
          %376 = sbr.rel (%p374) target = $region20
        $region19: #{tpu_custom_call.1} parent=11 // pred_region
          _
        $region20: #{tpu_custom_call.1} parent=11 // pred_fallthru
          _
        // Predicated region
        $region21: #{tpu_custom_call.1} parent=11 // pred_check
          %p377 = pneg %p146
        $region22: #{tpu_custom_call.1} parent=11 // pred_check_branch
          %379 = sbr.rel (%p377) target = $region24
        $region23: #{tpu_custom_call.1} parent=11 // pred_region
          %381 = vsyncadd [#allocation9], 0
          %s382 = sshll.u32 %s4, 4
          %s383 = int_to_ptr.hbm [resolvable:$true] %s382
          %s384 = sshll.u32 [#allocation8], 4
          %s385 = int_to_ptr.vmem [resolvable:$true] %s384
          %390 = dma.hbm_to_vmem [thread:$0]  %s383, 2048, %s385, [#allocation9], 128, 128, 8
        $region24: #{tpu_custom_call.1} parent=11 // pred_fallthru
          _
        // Predicated region
        $region25: #{tpu_custom_call.1} parent=11 // pred_check
          %p391 = pneg %p167
        $region26: #{tpu_custom_call.1} parent=11 // pred_check_branch
          %393 = sbr.rel (%p391) target = $region28
        $region27: #{tpu_custom_call.1} parent=11 // pred_region
          _
        $region28: #{tpu_custom_call.1} parent=11 // pred_fallthru
          _
        // Predicated region
        $region29: #{tpu_custom_call.1} parent=11 // pred_check
          %p394 = pneg %p188
        $region30: #{tpu_custom_call.1} parent=11 // pred_check_branch
          %396 = sbr.rel (%p394) target = $region32
        $region31: #{tpu_custom_call.1} parent=11 // pred_region
          %398 = vsyncadd [#allocation9], 0
          %s399 = sshll.u32 %s6, 4
          %s400 = int_to_ptr.hbm [resolvable:$true] %s399
          %s401 = sshll.u32 [#allocation10], 4
          %s402 = int_to_ptr.vmem [resolvable:$true] %s401
          %407 = dma.hbm_to_vmem [thread:$0]  %s400, 2048, %s402, [#allocation9], 128, 128, 8
        $region32: #{tpu_custom_call.1} parent=11 // pred_fallthru
          _
        // Predicated region
        $region33: #{tpu_custom_call.1} parent=11 // pred_check
          %p408 = pneg %p209
        $region34: #{tpu_custom_call.1} parent=11 // pred_check_branch
          %410 = sbr.rel (%p408) target = $region36
        $region35: #{tpu_custom_call.1} parent=11 // pred_region
          _
        $region36: #{tpu_custom_call.1} parent=11 // pred_fallthru
          _
        // Predicated region
        $region37: #{tpu_custom_call.1} parent=11 // pred_check
          %p411 = pneg %p230
        $region38: #{tpu_custom_call.1} parent=11 // pred_check_branch
          %413 = sbr.rel (%p411) target = $region40
        $region39: #{tpu_custom_call.1} parent=11 // pred_region
          %415 = vsyncadd [#allocation12], 0
          %s416 = sshll.u32 %s8, 4
          %s417 = int_to_ptr.hbm [resolvable:$true] %s416
          %s418 = sshll.u32 [#allocation11], 4
          %s419 = int_to_ptr.vmem [resolvable:$true] %s418
          %424 = dma.hbm_to_vmem [thread:$0]  %s417, 2048, %s419, [#allocation12], 128, 128, 8
        $region40: #{tpu_custom_call.1} parent=11 // pred_fallthru
          _
        // Predicated region
        $region41: #{tpu_custom_call.1} parent=11 // pred_check
          %p425 = pneg %p251
        $region42: #{tpu_custom_call.1} parent=11 // pred_check_branch
          %427 = sbr.rel (%p425) target = $region44
        $region43: #{tpu_custom_call.1} parent=11 // pred_region
          _
        $region44: #{tpu_custom_call.1} parent=11 // pred_fallthru
          _
        // Predicated region
        $region45: #{tpu_custom_call.1} parent=11 // pred_check
          %p428 = pneg %p272
        $region46: #{tpu_custom_call.1} parent=11 // pred_check_branch
          %430 = sbr.rel (%p428) target = $region48
        $region47: #{tpu_custom_call.1} parent=11 // pred_region
          %432 = vsyncadd [#allocation12], 0
          %s433 = sshll.u32 %s10, 4
          %s434 = int_to_ptr.hbm [resolvable:$true] %s433
          %s435 = sshll.u32 [#allocation13], 4
          %s436 = int_to_ptr.vmem [resolvable:$true] %s435
          %441 = dma.hbm_to_vmem [thread:$0]  %s434, 2048, %s436, [#allocation12], 128, 128, 8
        $region48: #{tpu_custom_call.1} parent=11 // pred_fallthru
          _
        // Predicated region
        $region49: #{tpu_custom_call.1} parent=11 // pred_check
          %p442 = pneg %p293
        $region50: #{tpu_custom_call.1} parent=11 // pred_check_branch
          %444 = sbr.rel (%p442) target = $region52
        $region51: #{tpu_custom_call.1} parent=11 // pred_region
          _
        $region52: #{tpu_custom_call.1} parent=11 // pred_fallthru
          _
      $region12: #{tpu_custom_call.1} parent=5 // pred_fallthru
        _
      %p445 = scmp.lt.s32.totalorder %s31, 2
      // Predicated region
      $region53: #{tpu_custom_call.1} parent=5 // pred_check
        %p446 = pneg %p445
      $region54: #{tpu_custom_call.1} parent=5 // pred_check_branch
        %448 = sbr.rel (%p446) target = $region56
      $region55: #{tpu_custom_call.1} parent=5 // pred_region
        // Predicated region
        $region57: #{tpu_custom_call.1} parent=55 // pred_check
          %p449 = pneg %p51
        $region58: #{tpu_custom_call.1} parent=55 // pred_check_branch
          %451 = sbr.rel (%p449) target = $region60
        $region59: #{tpu_custom_call.1} parent=55 // pred_region
          %s452 = sand.u32 %s41, 1
          %s453 = scalar_lea.sflag [#allocation3], %s452
          %s454 = sand.u32 %s41, 1
          %s455 = smul.addr %s454, 8
          %s456 = scalar_lea.vmem [#allocation2], %s455
          %458 = vsyncadd %s453, 0
          %s459 = smul.addr %s31, 8
          %s460 = scalar_lea.hbm %s0, %s459
          %s462 = sshll.u32 %s460, 4
          %s463 = int_to_ptr.hbm [resolvable:$true] %s462
          %s464 = sshll.u32 %s456, 4
          %s465 = int_to_ptr.vmem [resolvable:$true] %s464
          %467 = dma.hbm_to_vmem [thread:$0]  %s463, 128, %s465, %s453
        $region60: #{tpu_custom_call.1} parent=55 // pred_fallthru
          _
        // Predicated region
        $region61: #{tpu_custom_call.1} parent=55 // pred_check
          %p468 = pneg %p77
        $region62: #{tpu_custom_call.1} parent=55 // pred_check_branch
          %470 = sbr.rel (%p468) target = $region64
        $region63: #{tpu_custom_call.1} parent=55 // pred_region
          %s471 = sand.u32 %s31, 1
          %s472 = scalar_lea.sflag [#allocation6], %s471
          %s473 = sand.u32 %s67, 1
          %s474 = smul.addr %s473, 8
          %s475 = scalar_lea.vmem [#allocation5], %s474
          %477 = vsyncadd %s472, 0
          %s478 = smul.addr %s31, 8
          %s479 = scalar_lea.hbm %s1, %s478
          %s481 = sshll.u32 %s479, 4
          %s482 = int_to_ptr.hbm [resolvable:$true] %s481
          %s483 = sshll.u32 %s475, 4
          %s484 = int_to_ptr.vmem [resolvable:$true] %s483
          %486 = dma.hbm_to_vmem [thread:$0]  %s482, 128, %s484, %s472
        $region64: #{tpu_custom_call.1} parent=55 // pred_fallthru
          _
      $region56: #{tpu_custom_call.1} parent=5 // pred_fallthru
        _
      %p487 = scmp.le.s32.totalorder 1, %s31
      %p488 = scmp.lt.s32.totalorder %s31, 3
      %p489 = pnand %p487, %p488
      %p490 = pneg %p489
      // Predicated region
      $region65: #{tpu_custom_call.1} parent=5 // pred_check
        _
      $region66: #{tpu_custom_call.1} parent=5 // pred_check_branch
        %492 = sbr.rel (%p489) target = $region68
      $region67: #{tpu_custom_call.1} parent=5 // pred_region
        %s493 = ssub.s32 %s31, 1
        %s494 = sand.u32 %s44, 1
        %s495 = scalar_lea.sflag [#allocation3], %s494
        %s496 = sand.u32 %s44, 1
        %s497 = smul.addr %s496, 8
        %s498 = scalar_lea.vmem [#allocation2], %s497
        // Predicated region
        $region69: #{tpu_custom_call.1} parent=67 // pred_check
          %p499 = pneg %p57
        $region70: #{tpu_custom_call.1} parent=67 // pred_check_branch
          %501 = sbr.rel (%p499) target = $region72
        $region71: #{tpu_custom_call.1} parent=67 // pred_region
          %503 = dma.done %s495, 128
        $region72: #{tpu_custom_call.1} parent=67 // pred_fallthru
          _
        %s504 = sand.u32 %s36, 1
        %s505 = scalar_lea.sflag [#allocation6], %s504
        %s506 = sand.u32 %s70, 1
        %s507 = smul.addr %s506, 8
        %s508 = scalar_lea.vmem [#allocation5], %s507
        // Predicated region
        $region73: #{tpu_custom_call.1} parent=67 // pred_check
          %p509 = pneg %p83
        $region74: #{tpu_custom_call.1} parent=67 // pred_check_branch
          %511 = sbr.rel (%p509) target = $region76
        $region75: #{tpu_custom_call.1} parent=67 // pred_region
          %513 = dma.done %s505, 128
        $region76: #{tpu_custom_call.1} parent=67 // pred_fallthru
          _
        // Predicated region
        $region77: #{tpu_custom_call.1} parent=67 // pred_check
          %p514 = pneg %p104
        $region78: #{tpu_custom_call.1} parent=67 // pred_check_branch
          %516 = sbr.rel (%p514) target = $region80
        $region79: #{tpu_custom_call.1} parent=67 // pred_region
          %518 = dma.done [#allocation6], 2048
        $region80: #{tpu_custom_call.1} parent=67 // pred_fallthru
          _
        // Predicated region
        $region81: #{tpu_custom_call.1} parent=67 // pred_check
          %p519 = pneg %p146
        $region82: #{tpu_custom_call.1} parent=67 // pred_check_branch
          %521 = sbr.rel (%p519) target = $region84
        $region83: #{tpu_custom_call.1} parent=67 // pred_region
          %523 = dma.done [#allocation9], 2048
        $region84: #{tpu_custom_call.1} parent=67 // pred_fallthru
          _
        // Predicated region
        $region85: #{tpu_custom_call.1} parent=67 // pred_check
          %p524 = pneg %p188
        $region86: #{tpu_custom_call.1} parent=67 // pred_check_branch
          %526 = sbr.rel (%p524) target = $region88
        $region87: #{tpu_custom_call.1} parent=67 // pred_region
          %528 = dma.done [#allocation9], 2048
        $region88: #{tpu_custom_call.1} parent=67 // pred_fallthru
          _
        // Predicated region
        $region89: #{tpu_custom_call.1} parent=67 // pred_check
          %p529 = pneg %p230
        $region90: #{tpu_custom_call.1} parent=67 // pred_check_branch
          %531 = sbr.rel (%p529) target = $region92
        $region91: #{tpu_custom_call.1} parent=67 // pred_region
          %533 = dma.done [#allocation12], 2048
        $region92: #{tpu_custom_call.1} parent=67 // pred_fallthru
          _
        // Predicated region
        $region93: #{tpu_custom_call.1} parent=67 // pred_check
          %p534 = pneg %p272
        $region94: #{tpu_custom_call.1} parent=67 // pred_check_branch
          %536 = sbr.rel (%p534) target = $region96
        $region95: #{tpu_custom_call.1} parent=67 // pred_region
          %538 = dma.done [#allocation12], 2048
        $region96: #{tpu_custom_call.1} parent=67 // pred_fallthru
          _
        %s539 = sand.u32 %s44, 1
        %s540 = scalar_lea.sflag [#allocation3], %s539
        %s541 = sand.u32 %s44, 1
        %s542 = smul.addr %s541, 8
        %s543 = scalar_lea.vmem [#allocation2], %s542
        %p544 = pneg %p57
        %p545 = pneg %p54
        %s546 = sand.u32 %s36, 1
        %s547 = scalar_lea.sflag [#allocation6], %s546
        %s548 = sand.u32 %s70, 1
        %s549 = smul.addr %s548, 8
        %s550 = scalar_lea.vmem [#allocation5], %s549
        %p551 = pneg %p83
        %p552 = pneg %p80
        %p553 = pneg %p104
        %p554 = pneg %p101
        %p555 = pneg %p125
        %p556 = pneg %p122
        %p557 = pneg %p146
        %p558 = pneg %p143
        %p559 = pneg %p167
        %p560 = pneg %p164
        %p561 = pneg %p188
        %p562 = pneg %p185
        %p563 = pneg %p209
        %p564 = pneg %p206
        %p565 = pneg %p230
        %p566 = pneg %p227
        %p567 = pneg %p251
        %p568 = pneg %p248
        %p569 = pneg %p272
        %p570 = pneg %p269
        %p571 = pneg %p293
        %p572 = pneg %p290
        %p573 = pneg %p319
        %p574 = pneg %p316
        %s575 = sand.u32 %s306, 1
        %s576 = scalar_lea.sflag [#allocation4], %s575
        %s577 = sand.u32 %s306, 1
        %s578 = smul.addr %s577, 8
        %s579 = scalar_lea.vmem [#allocation14], %s578
        %p580 = pneg %p345
        %p581 = pneg %p342
        %p582 = scmp.lt.s32.totalorder %s36, 1
        %s583 = scalar_select %p582, %s36, 1
        %s584 = smul.addr %s583, 8
        %s585 = scalar_lea.vmem %s13, %s584
        %p586 = scmp.lt.s32.totalorder %s36, 1
        %s587 = scalar_select %p586, %s36, 1
        %s588 = smul.addr %s587, 8
        %s589 = scalar_lea.vmem %s13, %s588
        %v590 = vld [vmem:[%s498] sm:$0xff]
        %v591 = vld [vmem:[#allocation7] sm:$0xff]
        %v592 = vld [vmem:[#allocation7 + $0x8] sm:$0xff]
        %v593 = vld [vmem:[#allocation7 + $0x10] sm:$0xff]
        %v594 = vld [vmem:[#allocation7 + $0x18] sm:$0xff]
        %v595 = vld [vmem:[#allocation7 + $0x20] sm:$0xff]
        %v596 = vld [vmem:[#allocation7 + $0x28] sm:$0xff]
        %v597 = vld [vmem:[#allocation7 + $0x30] sm:$0xff]
        %v598 = vld [vmem:[#allocation7 + $0x38] sm:$0xff]
        %v599 = vld [vmem:[#allocation7 + $0x40] sm:$0xff]
        %v600 = vld [vmem:[#allocation7 + $0x48] sm:$0xff]
        %v601 = vld [vmem:[#allocation7 + $0x50] sm:$0xff]
        %v602 = vld [vmem:[#allocation7 + $0x58] sm:$0xff]
        %v603 = vld [vmem:[#allocation7 + $0x60] sm:$0xff]
        %v604 = vld [vmem:[#allocation7 + $0x68] sm:$0xff]
        %v605 = vld [vmem:[#allocation7 + $0x70] sm:$0xff]
        %v606 = vld [vmem:[#allocation7 + $0x78] sm:$0xff]
        %v607 = vld [vmem:[%s3] sm:$0x1]
        %v609 = vperm.slane %v607, 0
        %611 = vmatpush.msra.mxu0 %v606
        %612 = vmatpush.msra.mxu0 %v605
        %613 = vmatpush.msra.mxu0 %v604
        %614 = vmatpush.msra.mxu0 %v603
        %615 = vmatpush.msra.mxu0 %v602
        %616 = vmatpush.msra.mxu0 %v601
        %617 = vmatpush.msra.mxu0 %v600
        %618 = vmatpush.msra.mxu0 %v599
        %619 = vmatpush.msra.mxu0 %v598
        %620 = vmatpush.msra.mxu0 %v597
        %621 = vmatpush.msra.mxu0 %v596
        %622 = vmatpush.msra.mxu0 %v595
        %623 = vmatpush.msra.mxu0 %v594
        %624 = vmatpush.msra.mxu0 %v593
        %625 = vmatpush.msra.mxu0 %v592
        %626 = vmatpush.msra.mxu0 %v591
        %627 = vmatmul.f32.gmra.mxu0 %v590
        %v628 = vpop.f32.mrf.mxu0
        %v629 = vadd.f32 %v609, %v628
        %630 = vdwg.mxu0
        %v631 = vmax.f32 %v629, 0.0
        %v632 = vld [vmem:[#allocation8] sm:$0xff]
        %v633 = vld [vmem:[#allocation8 + $0x8] sm:$0xff]
        %v634 = vld [vmem:[#allocation8 + $0x10] sm:$0xff]
        %v635 = vld [vmem:[#allocation8 + $0x18] sm:$0xff]
        %v636 = vld [vmem:[#allocation8 + $0x20] sm:$0xff]
        %v637 = vld [vmem:[#allocation8 + $0x28] sm:$0xff]
        %v638 = vld [vmem:[#allocation8 + $0x30] sm:$0xff]
        %v639 = vld [vmem:[#allocation8 + $0x38] sm:$0xff]
        %v640 = vld [vmem:[#allocation8 + $0x40] sm:$0xff]
        %v641 = vld [vmem:[#allocation8 + $0x48] sm:$0xff]
        %v642 = vld [vmem:[#allocation8 + $0x50] sm:$0xff]
        %v643 = vld [vmem:[#allocation8 + $0x58] sm:$0xff]
        %v644 = vld [vmem:[#allocation8 + $0x60] sm:$0xff]
        %v645 = vld [vmem:[#allocation8 + $0x68] sm:$0xff]
        %v646 = vld [vmem:[#allocation8 + $0x70] sm:$0xff]
        %v647 = vld [vmem:[#allocation8 + $0x78] sm:$0xff]
        %v648 = vld [vmem:[%s5] sm:$0x1]
        %v650 = vperm.slane %v648, 0
        %652 = vmatpush.msra.mxu0 %v647
        %653 = vmatpush.msra.mxu0 %v646
        %654 = vmatpush.msra.mxu0 %v645
        %655 = vmatpush.msra.mxu0 %v644
        %656 = vmatpush.msra.mxu0 %v643
        %657 = vmatpush.msra.mxu0 %v642
        %658 = vmatpush.msra.mxu0 %v641
        %659 = vmatpush.msra.mxu0 %v640
        %660 = vmatpush.msra.mxu0 %v639
        %661 = vmatpush.msra.mxu0 %v638
        %662 = vmatpush.msra.mxu0 %v637
        %663 = vmatpush.msra.mxu0 %v636
        %664 = vmatpush.msra.mxu0 %v635
        %665 = vmatpush.msra.mxu0 %v634
        %666 = vmatpush.msra.mxu0 %v633
        %667 = vmatpush.msra.mxu0 %v632
        %668 = vmatmul.f32.gmra.mxu0 %v631
        %v669 = vpop.f32.mrf.mxu0
        %v670 = vadd.f32 %v650, %v669
        %671 = vdwg.mxu0
        %v672 = vmax.f32 %v670, 0.0
        %v673 = vld [vmem:[#allocation10] sm:$0xff]
        %v674 = vld [vmem:[#allocation10 + $0x8] sm:$0xff]
        %v675 = vld [vmem:[#allocation10 + $0x10] sm:$0xff]
        %v676 = vld [vmem:[#allocation10 + $0x18] sm:$0xff]
        %v677 = vld [vmem:[#allocation10 + $0x20] sm:$0xff]
        %v678 = vld [vmem:[#allocation10 + $0x28] sm:$0xff]
        %v679 = vld [vmem:[#allocation10 + $0x30] sm:$0xff]
        %v680 = vld [vmem:[#allocation10 + $0x38] sm:$0xff]
        %v681 = vld [vmem:[#allocation10 + $0x40] sm:$0xff]
        %v682 = vld [vmem:[#allocation10 + $0x48] sm:$0xff]
        %v683 = vld [vmem:[#allocation10 + $0x50] sm:$0xff]
        %v684 = vld [vmem:[#allocation10 + $0x58] sm:$0xff]
        %v685 = vld [vmem:[#allocation10 + $0x60] sm:$0xff]
        %v686 = vld [vmem:[#allocation10 + $0x68] sm:$0xff]
        %v687 = vld [vmem:[#allocation10 + $0x70] sm:$0xff]
        %v688 = vld [vmem:[#allocation10 + $0x78] sm:$0xff]
        %v689 = vld [vmem:[%s7] sm:$0x1]
        %v691 = vperm.slane %v689, 0
        %693 = vmatpush.msra.mxu0 %v688
        %694 = vmatpush.msra.mxu0 %v687
        %695 = vmatpush.msra.mxu0 %v686
        %696 = vmatpush.msra.mxu0 %v685
        %697 = vmatpush.msra.mxu0 %v684
        %698 = vmatpush.msra.mxu0 %v683
        %699 = vmatpush.msra.mxu0 %v682
        %700 = vmatpush.msra.mxu0 %v681
        %701 = vmatpush.msra.mxu0 %v680
        %702 = vmatpush.msra.mxu0 %v679
        %703 = vmatpush.msra.mxu0 %v678
        %704 = vmatpush.msra.mxu0 %v677
        %705 = vmatpush.msra.mxu0 %v676
        %706 = vmatpush.msra.mxu0 %v675
        %707 = vmatpush.msra.mxu0 %v674
        %708 = vmatpush.msra.mxu0 %v673
        %709 = vmatmul.f32.gmra.mxu0 %v672
        %v710 = vpop.f32.mrf.mxu0
        %v711 = vadd.f32 %v691, %v710
        %712 = vdwg.mxu0
        %v713 = vmax.f32 %v711, 0.0
        %v714 = vld [vmem:[#allocation11] sm:$0xff]
        %v715 = vld [vmem:[#allocation11 + $0x8] sm:$0xff]
        %v716 = vld [vmem:[#allocation11 + $0x10] sm:$0xff]
        %v717 = vld [vmem:[#allocation11 + $0x18] sm:$0xff]
        %v718 = vld [vmem:[#allocation11 + $0x20] sm:$0xff]
        %v719 = vld [vmem:[#allocation11 + $0x28] sm:$0xff]
        %v720 = vld [vmem:[#allocation11 + $0x30] sm:$0xff]
        %v721 = vld [vmem:[#allocation11 + $0x38] sm:$0xff]
        %v722 = vld [vmem:[#allocation11 + $0x40] sm:$0xff]
        %v723 = vld [vmem:[#allocation11 + $0x48] sm:$0xff]
        %v724 = vld [vmem:[#allocation11 + $0x50] sm:$0xff]
        %v725 = vld [vmem:[#allocation11 + $0x58] sm:$0xff]
        %v726 = vld [vmem:[#allocation11 + $0x60] sm:$0xff]
        %v727 = vld [vmem:[#allocation11 + $0x68] sm:$0xff]
        %v728 = vld [vmem:[#allocation11 + $0x70] sm:$0xff]
        %v729 = vld [vmem:[#allocation11 + $0x78] sm:$0xff]
        %v730 = vld [vmem:[%s9] sm:$0x1]
        %v732 = vperm.slane %v730, 0
        %734 = vmatpush.msra.mxu0 %v729
        %735 = vmatpush.msra.mxu0 %v728
        %736 = vmatpush.msra.mxu0 %v727
        %737 = vmatpush.msra.mxu0 %v726
        %738 = vmatpush.msra.mxu0 %v725
        %739 = vmatpush.msra.mxu0 %v724
        %740 = vmatpush.msra.mxu0 %v723
        %741 = vmatpush.msra.mxu0 %v722
        %742 = vmatpush.msra.mxu0 %v721
        %743 = vmatpush.msra.mxu0 %v720
        %744 = vmatpush.msra.mxu0 %v719
        %745 = vmatpush.msra.mxu0 %v718
        %746 = vmatpush.msra.mxu0 %v717
        %747 = vmatpush.msra.mxu0 %v716
        %748 = vmatpush.msra.mxu0 %v715
        %749 = vmatpush.msra.mxu0 %v714
        %750 = vmatmul.f32.gmra.mxu0 %v713
        %v751 = vpop.f32.mrf.mxu0
        %v752 = vadd.f32 %v732, %v751
        %753 = vdwg.mxu0
        %v754 = vld [vmem:[#allocation13] sm:$0xff]
        %v755 = vld [vmem:[#allocation13 + $0x8] sm:$0xff]
        %v756 = vld [vmem:[#allocation13 + $0x10] sm:$0xff]
        %v757 = vld [vmem:[#allocation13 + $0x18] sm:$0xff]
        %v758 = vld [vmem:[#allocation13 + $0x20] sm:$0xff]
        %v759 = vld [vmem:[#allocation13 + $0x28] sm:$0xff]
        %v760 = vld [vmem:[#allocation13 + $0x30] sm:$0xff]
        %v761 = vld [vmem:[#allocation13 + $0x38] sm:$0xff]
        %v762 = vld [vmem:[#allocation13 + $0x40] sm:$0xff]
        %v763 = vld [vmem:[#allocation13 + $0x48] sm:$0xff]
        %v764 = vld [vmem:[#allocation13 + $0x50] sm:$0xff]
        %v765 = vld [vmem:[#allocation13 + $0x58] sm:$0xff]
        %v766 = vld [vmem:[#allocation13 + $0x60] sm:$0xff]
        %v767 = vld [vmem:[#allocation13 + $0x68] sm:$0xff]
        %v768 = vld [vmem:[#allocation13 + $0x70] sm:$0xff]
        %v769 = vld [vmem:[#allocation13 + $0x78] sm:$0xff]
        %v770 = vld [vmem:[%s11] sm:$0x1]
        %v772 = vperm.slane %v770, 0
        %774 = vmatpush.msra.mxu0 %v769
        %775 = vmatpush.msra.mxu0 %v768
        %776 = vmatpush.msra.mxu0 %v767
        %777 = vmatpush.msra.mxu0 %v766
        %778 = vmatpush.msra.mxu0 %v765
        %779 = vmatpush.msra.mxu0 %v764
        %780 = vmatpush.msra.mxu0 %v763
        %781 = vmatpush.msra.mxu0 %v762
        %782 = vmatpush.msra.mxu0 %v761
        %783 = vmatpush.msra.mxu0 %v760
        %784 = vmatpush.msra.mxu0 %v759
        %785 = vmatpush.msra.mxu0 %v758
        %786 = vmatpush.msra.mxu0 %v757
        %787 = vmatpush.msra.mxu0 %v756
        %788 = vmatpush.msra.mxu0 %v755
        %789 = vmatpush.msra.mxu0 %v754
        %790 = vmatmul.f32.gmra.mxu0 %v713
        %v791 = vpop.f32.mrf.mxu0
        %v792 = vadd.f32 %v772, %v791
        %793 = vdwg.mxu0
        %v794 = vmax.f32 %v792, -5.0
        %v795 = vmin.f32 %v794, 2.0
        %v796 = vmul.f32 %v795, 1.442695
        %v797 = vpow.pop %v796
        %v798 = vtanh.pop %v752
        %799 = vst [vmem:[%s579] sm:$0xff] %v798
        %v800 = vsub.f32 %v752, %v752
        %v801 = vrcp.pop %v797
        %v802 = vmul.f32 %v797, %v801
        %v803 = vsub.f32 1.0, %v802
        %v804 = vmul.f32 %v801, %v803
        %v805 = vadd.f32 %v801, %v804
        %vm806 = vweird.f32 %v797
        %vm807 = vweird.f32 %v801
        %vm808 = vmor %vm806, %vm807
        %v809 = vsel %vm808, %v801, %v805
        %v810 = vand.u32 2147483647, %v797
        %vm811 = vcmp.eq.f32.partialorder %v810, 8.507059e+37
        %v812 = vand.u32 %v797, 2147483648
        %v813 = vor.u32 1.1754944e-38, %v812
        %v814 = vsel %vm811, %v813, %v809
        %v815 = vmul.f32 %v800, %v814
        %v816 = vmul.f32 %v815, -0.5
        %v817 = vmul.f32 %v816, %v815
        %v818 = vsub.f32 %v817, %v795
        %v819 = vsub.f32 %v818, 0.9189385
        %v820 = vmul.f32 %v798, %v798
        %v821 = vsub.f32 1.0, %v820
        %v822 = vadd.f32 %v821, 1e-06
        %v823 = vlog2.pop %v822
        %v824 = vmul.f32 %v823, 0.6931472
        %v825 = vsub.f32 %v819, %v824
        %v826 = vlaneseq
        %v827 = vand.u32 %v826, 127
        %vm828 = vcmp.lt.s32.totalorder %v827, 6
        %v829 = vsel %vm828, %v825, 0.0
        %830 = vadd.xlane.f32.xlu0 %v829
        %v831 = vpop.xlane.xlu0 %830
        %vm832 = vcmask 7168
        %833 = vst.msk [vmem:[%s589] sm:$0xff] %vm832, %v831
        %s834 = sand.u32 %s306, 1
        %s835 = scalar_lea.sflag [#allocation4], %s834
        %s836 = sand.u32 %s306, 1
        %s837 = smul.addr %s836, 8
        %s838 = scalar_lea.vmem [#allocation14], %s837
        %p839 = scmp.lt.s32.totalorder %s36, 1
        %s840 = scalar_select %p839, %s36, 1
        %s841 = smul.addr %s840, 8
        %s842 = scalar_lea.vmem %s13, %s841
        // Predicated region
        $region97: #{tpu_custom_call.1} parent=67 // pred_check
          %p843 = pneg %p316
        $region98: #{tpu_custom_call.1} parent=67 // pred_check_branch
          %845 = sbr.rel (%p843) target = $region100
        $region99: #{tpu_custom_call.1} parent=67 // pred_region
          %847 = vsyncadd %s835, 0
          %s848 = smul.addr %s36, 8
          %s849 = scalar_lea.hbm %s12, %s848
          %s851 = sshll.u32 %s838, 4
          %s852 = int_to_ptr.vmem [resolvable:$true] %s851
          %s853 = sshll.u32 %s849, 4
          %s854 = int_to_ptr.hbm [resolvable:$true] %s853
          %856 = dma.vmem_to_hbm [thread:$0]  %s852, 128, %s854, %s835
        $region100: #{tpu_custom_call.1} parent=67 // pred_fallthru
          _
        // Predicated region
        $region101: #{tpu_custom_call.1} parent=67 // pred_check
          %p857 = pneg %p342
        $region102: #{tpu_custom_call.1} parent=67 // pred_check_branch
          %859 = sbr.rel (%p857) target = $region104
        $region103: #{tpu_custom_call.1} parent=67 // pred_region
          _
        $region104: #{tpu_custom_call.1} parent=67 // pred_fallthru
          _
      $region68: #{tpu_custom_call.1} parent=5 // pred_fallthru
        _
      %p860 = scmp.le.s32.totalorder 2, %s31
      // Predicated region
      $region105: #{tpu_custom_call.1} parent=5 // pred_check
        %p861 = pneg %p860
      $region106: #{tpu_custom_call.1} parent=5 // pred_check_branch
        %863 = sbr.rel (%p861) target = $region108
      $region107: #{tpu_custom_call.1} parent=5 // pred_region
        %s864 = ssub.s32 %s31, 2
        // Predicated region
        $region109: #{tpu_custom_call.1} parent=107 // pred_check
          %p865 = pneg %p322
        $region110: #{tpu_custom_call.1} parent=107 // pred_check_branch
          %867 = sbr.rel (%p865) target = $region112
        $region111: #{tpu_custom_call.1} parent=107 // pred_region
          %s868 = sand.u32 %s307, 1
          %s869 = scalar_lea.sflag [#allocation4], %s868
          %s870 = sand.u32 %s307, 1
          %s871 = smul.addr %s870, 8
          %s872 = scalar_lea.vmem [#allocation14], %s871
          %874 = dma.done %s869, 128
        $region112: #{tpu_custom_call.1} parent=107 // pred_fallthru
          _
        // Predicated region
        $region113: #{tpu_custom_call.1} parent=107 // pred_check
          %p875 = pneg %p348
        $region114: #{tpu_custom_call.1} parent=107 // pred_check_branch
          %877 = sbr.rel (%p875) target = $region116
        $region115: #{tpu_custom_call.1} parent=107 // pred_region
          %p878 = scmp.lt.s32.totalorder %s37, 1
          %s879 = scalar_select %p878, %s37, 1
          %s880 = smul.addr %s879, 8
          %s881 = scalar_lea.vmem %s13, %s880
        $region116: #{tpu_custom_call.1} parent=107 // pred_fallthru
          _
      $region108: #{tpu_custom_call.1} parent=5 // pred_fallthru
        _
    $region6: #{tpu_custom_call.1} parent=1 // loop_footer
      %s35 = sadd.s32 1, %s31
    $region7: #{tpu_custom_call.1} parent=1 // loop_footer_branch
      %30 = sbr.rel target = $region3
    $region8: #{tpu_custom_call.1} parent=1 // loop_exit
      _
    %882 = vsyncpa [#allocation3], 1
    %s883 = scalar_lea.sflag [#allocation3], 1
    %884 = vsyncpa %s883, 1
    %885 = vsyncpa [#allocation6], 1
    %s886 = scalar_lea.sflag [#allocation6], 1
    %887 = vsyncpa %s886, 1
    %888 = vsyncpa [#allocation9], 1
    %889 = vsyncpa [#allocation12], 1
    %890 = vsyncpa [#allocation4], 1
    %s891 = scalar_lea.sflag [#allocation4], 1
    %892 = vsyncpa %s891, 1

</llo_original>
